<compile_context>
chip_gen: v6e
topology: v6e:2x2x1
jax: 0.10.0
libtpu: 0.0.40
codegen_flags: <defaults>
</compile_context>

<pallas_src>
import jax
import jax.numpy as jnp
from jax.experimental import pallas as pl
from jax.experimental.pallas import tpu as pltpu


OUT_PAD = 128  # lane-dense padded logit width


def _round_up(x, m):
    return ((x + m - 1) // m) * m


def _mlp_kernel(img_ref, txt_ref, w1a_ref, w1b_ref, b1_ref,
                w2_ref, b2_ref, w3_ref, b3_ref, out_ref):
    cd = w1a_ref.dtype  # compute dtype for MXU inputs (bf16)

    img = img_ref[...].astype(cd)
    txt = txt_ref[...].astype(cd)

    # fc1 split over the concat axis: cat([img, txt]) @ W1 == img@W1a + txt@W1b
    h1 = (jnp.dot(img, w1a_ref[...], preferred_element_type=jnp.float32)
          + jnp.dot(txt, w1b_ref[...], preferred_element_type=jnp.float32)
          + b1_ref[...])
    h1 = jnp.maximum(h1, 0.0).astype(cd)          # relu in f32, cast for MXU

    # fc2 + relu
    h2 = jnp.dot(h1, w2_ref[...], preferred_element_type=jnp.float32) + b2_ref[...]
    h2 = jnp.maximum(h2, 0.0).astype(cd)

    # fc3 (lane-padded to 128 output columns -> unmasked full-lane stores)
    out_ref[...] = (jnp.dot(h2, w3_ref[...], preferred_element_type=jnp.float32)
                    + b3_ref[...])


def prepare_params(params, *, compute_dtype=jnp.bfloat16, out_pad=OUT_PAD):
    """One-time weight prep (call once, not per forward).

    Transposes PyTorch (out, in) weights to (in, out), splits fc1 into the
    image/text halves, zero-pads fc3 to `out_pad` lanes and casts matmul
    weights to `compute_dtype` (biases stay f32).
    """
    w1t = params["fc1_w"].T                               # (2E, 512)
    e = w1t.shape[0] // 2

    w3t = params["fc3_w"].T                               # (128, n_cls)
    n_cls = w3t.shape[1]
    w3p = jnp.zeros((w3t.shape[0], out_pad), compute_dtype)
    w3p = w3p.at[:, :n_cls].set(w3t.astype(compute_dtype))
    b3p = jnp.zeros((1, out_pad), jnp.float32)
    b3p = b3p.at[:, :n_cls].set(params["fc3_b"].astype(jnp.float32))

    return {
        "w1a": w1t[:e, :].astype(compute_dtype),          # (E, 512)
        "w1b": w1t[e:, :].astype(compute_dtype),          # (E, 512)
        "b1": params["fc1_b"].reshape(1, -1).astype(jnp.float32),
        "w2": params["fc2_w"].T.astype(compute_dtype),    # (512, 128)
        "b2": params["fc2_b"].reshape(1, -1).astype(jnp.float32),
        "w3": w3p,                                        # (128, out_pad)
        "b3": b3p,                                        # (1, out_pad)
        "num_classes": n_cls,
    }


def text_image_classifier_forward(image_features, text_features, prep,
                                  *, batch_tile=512):
    """Fused MLP head of TextImageClassifier.

    image_features: (B, E) -- output of model.encode_image
    text_features:  (B, E) -- output of model.encode_text
    prep: output of prepare_params()
    Returns (B, num_classes) f32 logits.
    """
    B, E = image_features.shape
    assert text_features.shape == (B, E)
    n_cls = prep["num_classes"]
    out_pad = prep["w3"].shape[1]

    # Adaptive batch tile: cap for small B, keep >=2 grid steps when possible
    # so the batch axis shards across both TensorCores on v7x.
    tile = min(batch_tile, _round_up(B, 8))
    steps = pl.cdiv(B, tile)
    if steps < 2 and B > 8:
        tile = _round_up(pl.cdiv(B, 2), 8)
        steps = pl.cdiv(B, tile)
    b_pad = steps * tile

    if b_pad != B:
        pad = ((0, b_pad - B), (0, 0))
        image_features = jnp.pad(image_features, pad)
        text_features = jnp.pad(text_features, pad)

    def batch_map(i):
        return (i, 0)

    def full_map(i):
        return (0, 0)

    out = pl.pallas_call(
        _mlp_kernel,
        out_shape=jax.ShapeDtypeStruct((b_pad, out_pad), jnp.float32),
        grid_spec=pltpu.PrefetchScalarGridSpec(
            num_scalar_prefetch=0,
            grid=(steps,),
            in_specs=[
                pl.BlockSpec((tile, E), batch_map),          # image feats
                pl.BlockSpec((tile, E), batch_map),          # text feats
                pl.BlockSpec(prep["w1a"].shape, full_map),   # resident weights
                pl.BlockSpec(prep["w1b"].shape, full_map),
                pl.BlockSpec(prep["b1"].shape, full_map),
                pl.BlockSpec(prep["w2"].shape, full_map),
                pl.BlockSpec(prep["b2"].shape, full_map),
                pl.BlockSpec(prep["w3"].shape, full_map),
                pl.BlockSpec(prep["b3"].shape, full_map),
            ],
            out_specs=pl.BlockSpec((tile, out_pad), batch_map),
        ),
        compiler_params=pltpu.CompilerParams(
            dimension_semantics=("parallel",),
            vmem_limit_bytes=48 * 1024 * 1024),
    )(image_features, text_features,
      prep["w1a"], prep["w1b"], prep["b1"],
      prep["w2"], prep["b2"], prep["w3"], prep["b3"])

    return out[:B, :n_cls]


def init_params(key, embedding_size):
    """Deterministic synthetic init matching nn.Linear shapes (out, in)."""
    ks = jax.random.split(key, 6)
    scale = 0.02
    return {
        "fc1_w": scale * jax.random.normal(ks[0], (512, embedding_size * 2), jnp.float32),
        "fc1_b": scale * jax.random.normal(ks[1], (512,), jnp.float32),
        "fc2_w": scale * jax.random.normal(ks[2], (128, 512), jnp.float32),
        "fc2_b": scale * jax.random.normal(ks[3], (128,), jnp.float32),
        "fc3_w": scale * jax.random.normal(ks[4], (2, 128), jnp.float32),
        "fc3_b": scale * jax.random.normal(ks[5], (2,), jnp.float32),
    }


def _reference(image_features, text_features, prep):
    """Plain-JAX reference using the same prepared (bf16-quantized) weights."""
    cd = prep["w1a"].dtype
    f32 = jnp.float32
    img = image_features.astype(cd).astype(f32)
    txt = text_features.astype(cd).astype(f32)

    h1 = img @ prep["w1a"].astype(f32) + txt @ prep["w1b"].astype(f32) + prep["b1"]
    h1 = jnp.maximum(h1, 0.0).astype(cd).astype(f32)
    h2 = h1 @ prep["w2"].astype(f32) + prep["b2"]
    h2 = jnp.maximum(h2, 0.0).astype(cd).astype(f32)
    out = h2 @ prep["w3"].astype(f32) + prep["b3"]
    return out[:, :prep["num_classes"]]


if __name__ == "__main__":
    key = jax.random.PRNGKey(0)
    k_img, k_txt, k_par = jax.random.split(key, 3)

    B = 8          # batch
    E = 64         # synthetic CLIP embedding size (model.visual.output_dim)

    image_features = jax.random.normal(k_img, (B, E), jnp.float32)
    text_features = jax.random.normal(k_txt, (B, E), jnp.float32)
    params = init_params(k_par, E)
    prep = prepare_params(params)          # one-time weight prep (hoisted)

    out = text_image_classifier_forward(image_features, text_features, prep)
    out = jax.block_until_ready(out)

    ref = _reference(image_features, text_features, prep)
    assert out.shape == (B, 2)
    assert jnp.allclose(out, ref, atol=1e-3, rtol=1e-3), "mismatch vs reference"

    print("KERNEL_OK")
</pallas_src>

<mosaic_0001>
module attributes {stable_mosaic.version = 11 : i64} {
  func.func @_mlp_kernel(%arg0: i32, %arg1: memref<8x64xf32, #tpu.memory_space<vmem>>, %arg2: memref<8x64xf32, #tpu.memory_space<vmem>>, %arg3: memref<64x512xbf16, #tpu.memory_space<vmem>>, %arg4: memref<64x512xbf16, #tpu.memory_space<vmem>>, %arg5: memref<1x512xf32, #tpu.memory_space<vmem>>, %arg6: memref<512x128xbf16, #tpu.memory_space<vmem>>, %arg7: memref<1x128xf32, #tpu.memory_space<vmem>>, %arg8: memref<128x128xbf16, #tpu.memory_space<vmem>>, %arg9: memref<1x128xf32, #tpu.memory_space<vmem>>, %arg10: memref<8x128xf32, #tpu.memory_space<vmem>>) attributes {dimension_semantics = [#tpu.dimension_semantics<parallel>], iteration_bounds = array<i64: 1>, scalar_prefetch = 0 : i64, scratch_operands = 0 : i64, tpu.core_type = #tpu.core_type<tc>, window_params = [{transform_indices = @transform_0, window_bounds = array<i64: 8, 64>}, {transform_indices = @transform_1, window_bounds = array<i64: 8, 64>}, {pipeline_mode = #tpu.pipeline_mode<synchronous>, transform_indices = @transform_2, window_bounds = array<i64: 64, 512>}, {pipeline_mode = #tpu.pipeline_mode<synchronous>, transform_indices = @transform_3, window_bounds = array<i64: 64, 512>}, {pipeline_mode = #tpu.pipeline_mode<synchronous>, transform_indices = @transform_4, window_bounds = array<i64: 1, 512>}, {pipeline_mode = #tpu.pipeline_mode<synchronous>, transform_indices = @transform_5, window_bounds = array<i64: 512, 128>}, {pipeline_mode = #tpu.pipeline_mode<synchronous>, transform_indices = @transform_6, window_bounds = array<i64: 1, 128>}, {pipeline_mode = #tpu.pipeline_mode<synchronous>, transform_indices = @transform_7, window_bounds = array<i64: 128, 128>}, {pipeline_mode = #tpu.pipeline_mode<synchronous>, transform_indices = @transform_8, window_bounds = array<i64: 1, 128>}, {transform_indices = @transform_9, window_bounds = array<i64: 8, 128>}]} {
    %c0 = arith.constant 0 : index
    %c0_0 = arith.constant 0 : index
    %0 = vector.load %arg1[%c0, %c0_0] : memref<8x64xf32, #tpu.memory_space<vmem>>, vector<8x64xf32>
    %1 = arith.truncf %0 : vector<8x64xf32> to vector<8x64xbf16>
    %c0_1 = arith.constant 0 : index
    %c0_2 = arith.constant 0 : index
    %2 = vector.load %arg2[%c0_1, %c0_2] : memref<8x64xf32, #tpu.memory_space<vmem>>, vector<8x64xf32>
    %3 = arith.truncf %2 : vector<8x64xf32> to vector<8x64xbf16>
    %c0_3 = arith.constant 0 : index
    %c0_4 = arith.constant 0 : index
    %4 = vector.load %arg3[%c0_3, %c0_4] : memref<64x512xbf16, #tpu.memory_space<vmem>>, vector<64x512xbf16>
    %cst = arith.constant dense<0.000000e+00> : vector<8x512xf32>
    %5 = tpu.matmul %1, %4, %cst {dimension_numbers = #tpu.dot_dimension_numbers<[1], [0], [0], [1], [0, 0, 1, 1], [], []>} : vector<8x64xbf16>, vector<64x512xbf16>, vector<8x512xf32> -> vector<8x512xf32>
    %c0_5 = arith.constant 0 : index
    %c0_6 = arith.constant 0 : index
    %6 = vector.load %arg4[%c0_5, %c0_6] : memref<64x512xbf16, #tpu.memory_space<vmem>>, vector<64x512xbf16>
    %cst_7 = arith.constant dense<0.000000e+00> : vector<8x512xf32>
    %7 = tpu.matmul %3, %6, %cst_7 {dimension_numbers = #tpu.dot_dimension_numbers<[1], [0], [0], [1], [0, 0, 1, 1], [], []>} : vector<8x64xbf16>, vector<64x512xbf16>, vector<8x512xf32> -> vector<8x512xf32>
    %8 = arith.addf %5, %7 : vector<8x512xf32>
    %c0_8 = arith.constant 0 : index
    %c0_9 = arith.constant 0 : index
    %9 = vector.load %arg5[%c0_8, %c0_9] : memref<1x512xf32, #tpu.memory_space<vmem>>, vector<1x512xf32>
    %10 = vector.broadcast %9 : vector<1x512xf32> to vector<8x512xf32>
    %11 = arith.addf %8, %10 : vector<8x512xf32>
    %cst_10 = arith.constant 0.000000e+00 : f32
    %12 = vector.broadcast %cst_10 : f32 to vector<8x512xf32>
    %13 = arith.maximumf %11, %12 : vector<8x512xf32>
    %14 = arith.truncf %13 : vector<8x512xf32> to vector<8x512xbf16>
    %c0_11 = arith.constant 0 : index
    %c0_12 = arith.constant 0 : index
    %15 = vector.load %arg6[%c0_11, %c0_12] : memref<512x128xbf16, #tpu.memory_space<vmem>>, vector<512x128xbf16>
    %cst_13 = arith.constant dense<0.000000e+00> : vector<8x128xf32>
    %16 = tpu.matmul %14, %15, %cst_13 {dimension_numbers = #tpu.dot_dimension_numbers<[1], [0], [0], [1], [0, 0, 1, 1], [], []>} : vector<8x512xbf16>, vector<512x128xbf16>, vector<8x128xf32> -> vector<8x128xf32>
    %c0_14 = arith.constant 0 : index
    %c0_15 = arith.constant 0 : index
    %17 = vector.load %arg7[%c0_14, %c0_15] : memref<1x128xf32, #tpu.memory_space<vmem>>, vector<1x128xf32>
    %18 = vector.broadcast %17 : vector<1x128xf32> to vector<8x128xf32>
    %19 = arith.addf %16, %18 : vector<8x128xf32>
    %cst_16 = arith.constant 0.000000e+00 : f32
    %20 = vector.broadcast %cst_16 : f32 to vector<8x128xf32>
    %21 = arith.maximumf %19, %20 : vector<8x128xf32>
    %22 = arith.truncf %21 : vector<8x128xf32> to vector<8x128xbf16>
    %c0_17 = arith.constant 0 : index
    %c0_18 = arith.constant 0 : index
    %23 = vector.load %arg8[%c0_17, %c0_18] : memref<128x128xbf16, #tpu.memory_space<vmem>>, vector<128x128xbf16>
    %cst_19 = arith.constant dense<0.000000e+00> : vector<8x128xf32>
    %24 = tpu.matmul %22, %23, %cst_19 {dimension_numbers = #tpu.dot_dimension_numbers<[1], [0], [0], [1], [0, 0, 1, 1], [], []>} : vector<8x128xbf16>, vector<128x128xbf16>, vector<8x128xf32> -> vector<8x128xf32>
    %c0_20 = arith.constant 0 : index
    %c0_21 = arith.constant 0 : index
    %25 = vector.load %arg9[%c0_20, %c0_21] : memref<1x128xf32, #tpu.memory_space<vmem>>, vector<1x128xf32>
    %26 = vector.broadcast %25 : vector<1x128xf32> to vector<8x128xf32>
    %27 = arith.addf %24, %26 : vector<8x128xf32>
    %c0_22 = arith.constant 0 : index
    %c0_23 = arith.constant 0 : index
    %28 = vector.load %arg10[%c0_22, %c0_23] : memref<8x128xf32, #tpu.memory_space<vmem>>, vector<8x128xf32>
    tpu.vector_store %arg10[%c0_22, %c0_23], %27 {strides = array<i32>} : memref<8x128xf32, #tpu.memory_space<vmem>>, vector<8x128xf32>,
    return
  }
  func.func @transform_0(%arg0: i32) -> (i32, i32) {
    %c0_i32 = arith.constant 0 : i32
    %c0_i32_0 = arith.constant 0 : i32
    return %arg0, %c0_i32 : i32, i32
  }
  func.func @transform_1(%arg0: i32) -> (i32, i32) {
    %c0_i32 = arith.constant 0 : i32
    %c0_i32_0 = arith.constant 0 : i32
    return %arg0, %c0_i32 : i32, i32
  }
  func.func @transform_2(%arg0: i32) -> (i32, i32) {
    %c0_i32 = arith.constant 0 : i32
    %c0_i32_0 = arith.constant 0 : i32
    %c0_i32_1 = arith.constant 0 : i32
    return %c0_i32, %c0_i32_0 : i32, i32
  }
  func.func @transform_3(%arg0: i32) -> (i32, i32) {
    %c0_i32 = arith.constant 0 : i32
    %c0_i32_0 = arith.constant 0 : i32
    %c0_i32_1 = arith.constant 0 : i32
    return %c0_i32, %c0_i32_0 : i32, i32
  }
  func.func @transform_4(%arg0: i32) -> (i32, i32) {
    %c0_i32 = arith.constant 0 : i32
    %c0_i32_0 = arith.constant 0 : i32
    %c0_i32_1 = arith.constant 0 : i32
    return %c0_i32, %c0_i32_0 : i32, i32
  }
  func.func @transform_5(%arg0: i32) -> (i32, i32) {
    %c0_i32 = arith.constant 0 : i32
    %c0_i32_0 = arith.constant 0 : i32
    %c0_i32_1 = arith.constant 0 : i32
    return %c0_i32, %c0_i32_0 : i32, i32
  }
  func.func @transform_6(%arg0: i32) -> (i32, i32) {
    %c0_i32 = arith.constant 0 : i32
    %c0_i32_0 = arith.constant 0 : i32
    %c0_i32_1 = arith.constant 0 : i32
    return %c0_i32, %c0_i32_0 : i32, i32
  }
  func.func @transform_7(%arg0: i32) -> (i32, i32) {
    %c0_i32 = arith.constant 0 : i32
    %c0_i32_0 = arith.constant 0 : i32
    %c0_i32_1 = arith.constant 0 : i32
    return %c0_i32, %c0_i32_0 : i32, i32
  }
  func.func @transform_8(%arg0: i32) -> (i32, i32) {
    %c0_i32 = arith.constant 0 : i32
    %c0_i32_0 = arith.constant 0 : i32
    %c0_i32_1 = arith.constant 0 : i32
    return %c0_i32, %c0_i32_0 : i32, i32
  }
  func.func @transform_9(%arg0: i32) -> (i32, i32) {
    %c0_i32 = arith.constant 0 : i32
    %c0_i32_0 = arith.constant 0 : i32
    return %arg0, %c0_i32 : i32, i32
  }
}

</mosaic_0001>

<llo_original>
// kernel: tpu_custom_call.1
$region0: #{tpu_custom_call.1}
  #allocation0 [shape = 'u32[]', space=smem, size = 0x4, offset = 0x4, fixed_abs, tag = 'smem constant byte address 0x4 - core index']
  #allocation1 [shape = 'u32[144,128]{1,0:T(1,128)}', space=vmem, size = 0x12000, scoped, tag = 'internal scratch']
  %s0 = inlined_call_operand.hbm [shape: f32[8,64], index: 0, kind: input, shape index: {}]
  %s1 = inlined_call_operand.hbm [shape: f32[8,64], index: 1, kind: input, shape index: {}]
  %s2 = inlined_call_operand.hbm [shape: bf16[64,512], index: 2, kind: input, shape index: {}]
  %s3 = inlined_call_operand.hbm [shape: bf16[64,512], index: 3, kind: input, shape index: {}]
  %s4 = inlined_call_operand.vmem [shape: f32[1,512], index: 4, kind: input, shape index: {}]
  %s5 = inlined_call_operand.hbm [shape: bf16[512,128], index: 5, kind: input, shape index: {}]
  %s6 = inlined_call_operand.vmem [shape: f32[1,128], index: 6, kind: input, shape index: {}]
  %s7 = inlined_call_operand.hbm [shape: bf16[128,128], index: 7, kind: input, shape index: {}]
  %s8 = inlined_call_operand.vmem [shape: f32[1,128], index: 8, kind: input, shape index: {}]
  %s9 = inlined_call_operand.hbm [shape: f32[8,128], index: 9, kind: output, shape index: {}]
  %s10 = sld [smem:[#allocation0]]
  $region70: #{tpu_custom_call.1} parent=0
    _
  %s12 = ssub.s32 1, %s10
  %s13 = scalar_select 0, %s12, %s10
  $region1: #{tpu_custom_call.1} parent=0
    #allocation2 [shape = 'u8[4096]{0}', space=vmem, size = 0x1000, scoped, tag = 'input window, operand 0, single buffered']
    #allocation3 [shape = 's32[1]{0}', space=sflag, size = 0x4, scoped, tag = 'scoped memory for tpu_custom_call.1']
    #allocation4 [shape = 's32[1]{0}', space=sflag, size = 0x4, scoped, tag = 'scoped memory for tpu_custom_call.1']
    #allocation5 [shape = 'u8[4096]{0}', space=vmem, size = 0x1000, scoped, tag = 'input window, operand 1, single buffered']
    #allocation6 [shape = 's32[1]{0}', space=sflag, size = 0x4, scoped, tag = 'scoped memory for tpu_custom_call.1']
    #allocation7 [shape = 'u8[65536]{0}', space=vmem, size = 0x10000, scoped, tag = 'input window, operand 2, single buffered']
    #allocation8 [shape = 'u8[65536]{0}', space=vmem, size = 0x10000, scoped, tag = 'input window, operand 3, single buffered']
    #allocation9 [shape = 's32[1]{0}', space=sflag, size = 0x4, scoped, tag = 'scoped memory for tpu_custom_call.1']
    #allocation10 [shape = 'u8[131072]{0}', space=vmem, size = 0x20000, scoped, tag = 'input window, operand 5, single buffered']
    #allocation11 [shape = 'u8[32768]{0}', space=vmem, size = 0x8000, scoped, tag = 'input window, operand 7, single buffered']
    #allocation12 [shape = 's32[1]{0}', space=sflag, size = 0x4, scoped, tag = 'scoped memory for tpu_custom_call.1']
    #allocation13 [shape = 'u8[4096]{0}', space=vmem, size = 0x1000, scoped, tag = 'output window, operand 0, single buffered']
    %14 = vsyncpa [#allocation3], 0
    %15 = vsyncpa [#allocation6], 0
    %16 = vsyncpa [#allocation9], 0
    %17 = vsyncpa [#allocation12], 0
    %18 = vsyncpa [#allocation4], 0
    // Predicated region
    $region2: #{tpu_custom_call.1} parent=1 // pred_check
      _
    $region3: #{tpu_custom_call.1} parent=1 // pred_check_branch
      %20 = sbr.rel (0) target = $region5
    $region4: #{tpu_custom_call.1} parent=1 // pred_region
      %s22 = ssub.s32 128, 128
      %23 = vsyncadd [#allocation3], %s22
      %s25 = sshll.u32 [#allocation2], 4
      %s26 = int_to_ptr.vmem [resolvable:$true] %s25
      %28 = dma.hbm_to_vmem [thread:$0]  %s0, 128, %s26, [#allocation3]
    $region5: #{tpu_custom_call.1} parent=1 // pred_fallthru
      _
    // Predicated region
    $region6: #{tpu_custom_call.1} parent=1 // pred_check
      _
    $region7: #{tpu_custom_call.1} parent=1 // pred_check_branch
      %30 = sbr.rel (0) target = $region9
    $region8: #{tpu_custom_call.1} parent=1 // pred_region
      %s32 = ssub.s32 128, 128
      %33 = vsyncadd [#allocation6], %s32
      %s35 = sshll.u32 [#allocation5], 4
      %s36 = int_to_ptr.vmem [resolvable:$true] %s35
      %38 = dma.hbm_to_vmem [thread:$0]  %s1, 128, %s36, [#allocation6]
    $region9: #{tpu_custom_call.1} parent=1 // pred_fallthru
      _
    // Predicated region
    $region10: #{tpu_custom_call.1} parent=1 // pred_check
      _
    $region11: #{tpu_custom_call.1} parent=1 // pred_check_branch
      %40 = sbr.rel (0) target = $region13
    $region12: #{tpu_custom_call.1} parent=1 // pred_region
      %s42 = ssub.s32 2048, 2048
      %43 = vsyncadd [#allocation6], %s42
      %s44 = sshll.u32 [#allocation7], 4
      %s45 = int_to_ptr.vmem [resolvable:$true] %s44
      %50 = dma.hbm_to_vmem [thread:$0]  %s2, 2048, %s45, [#allocation6], 256, 256, 16
    $region13: #{tpu_custom_call.1} parent=1 // pred_fallthru
      _
    // Predicated region
    $region14: #{tpu_custom_call.1} parent=1 // pred_check
      _
    $region15: #{tpu_custom_call.1} parent=1 // pred_check_branch
      %52 = sbr.rel (0) target = $region17
    $region16: #{tpu_custom_call.1} parent=1 // pred_region
      %s54 = ssub.s32 2048, 2048
      %55 = vsyncadd [#allocation9], %s54
      %s56 = sshll.u32 [#allocation8], 4
      %s57 = int_to_ptr.vmem [resolvable:$true] %s56
      %62 = dma.hbm_to_vmem [thread:$0]  %s3, 2048, %s57, [#allocation9], 256, 256, 16
    $region17: #{tpu_custom_call.1} parent=1 // pred_fallthru
      _
    // Predicated region
    $region18: #{tpu_custom_call.1} parent=1 // pred_check
      _
    $region19: #{tpu_custom_call.1} parent=1 // pred_check_branch
      %64 = sbr.rel (0) target = $region21
    $region20: #{tpu_custom_call.1} parent=1 // pred_region
      _
    $region21: #{tpu_custom_call.1} parent=1 // pred_fallthru
      _
    // Predicated region
    $region22: #{tpu_custom_call.1} parent=1 // pred_check
      _
    $region23: #{tpu_custom_call.1} parent=1 // pred_check_branch
      %66 = sbr.rel (0) target = $region25
    $region24: #{tpu_custom_call.1} parent=1 // pred_region
      %s68 = ssub.s32 4096, 4096
      %69 = vsyncadd [#allocation9], %s68
      %s70 = sshll.u32 [#allocation10], 4
      %s71 = int_to_ptr.vmem [resolvable:$true] %s70
      %76 = dma.hbm_to_vmem [thread:$0]  %s5, 4096, %s71, [#allocation9], 64, 64, 4
    $region25: #{tpu_custom_call.1} parent=1 // pred_fallthru
      _
    // Predicated region
    $region26: #{tpu_custom_call.1} parent=1 // pred_check
      _
    $region27: #{tpu_custom_call.1} parent=1 // pred_check_branch
      %78 = sbr.rel (0) target = $region29
    $region28: #{tpu_custom_call.1} parent=1 // pred_region
      _
    $region29: #{tpu_custom_call.1} parent=1 // pred_fallthru
      _
    // Predicated region
    $region30: #{tpu_custom_call.1} parent=1 // pred_check
      _
    $region31: #{tpu_custom_call.1} parent=1 // pred_check_branch
      %80 = sbr.rel (0) target = $region33
    $region32: #{tpu_custom_call.1} parent=1 // pred_region
      %s82 = ssub.s32 1024, 1024
      %83 = vsyncadd [#allocation12], %s82
      %s84 = sshll.u32 [#allocation11], 4
      %s85 = int_to_ptr.vmem [resolvable:$true] %s84
      %90 = dma.hbm_to_vmem [thread:$0]  %s7, 1024, %s85, [#allocation12], 64, 64, 4
    $region33: #{tpu_custom_call.1} parent=1 // pred_fallthru
      _
    // Predicated region
    $region34: #{tpu_custom_call.1} parent=1 // pred_check
      _
    $region35: #{tpu_custom_call.1} parent=1 // pred_check_branch
      %92 = sbr.rel (0) target = $region37
    $region36: #{tpu_custom_call.1} parent=1 // pred_region
      _
    $region37: #{tpu_custom_call.1} parent=1 // pred_fallthru
      _
    // Predicated region
    $region38: #{tpu_custom_call.1} parent=1 // pred_check
      _
    $region39: #{tpu_custom_call.1} parent=1 // pred_check_branch
      %94 = sbr.rel (0) target = $region41
    $region40: #{tpu_custom_call.1} parent=1 // pred_region
      %95 = dma.done [#allocation3], 128
    $region41: #{tpu_custom_call.1} parent=1 // pred_fallthru
      _
    // Predicated region
    $region42: #{tpu_custom_call.1} parent=1 // pred_check
      _
    $region43: #{tpu_custom_call.1} parent=1 // pred_check_branch
      %97 = sbr.rel (0) target = $region45
    $region44: #{tpu_custom_call.1} parent=1 // pred_region
      %98 = dma.done [#allocation6], 128
    $region45: #{tpu_custom_call.1} parent=1 // pred_fallthru
      _
    // Predicated region
    $region46: #{tpu_custom_call.1} parent=1 // pred_check
      _
    $region47: #{tpu_custom_call.1} parent=1 // pred_check_branch
      %100 = sbr.rel (0) target = $region49
    $region48: #{tpu_custom_call.1} parent=1 // pred_region
      %101 = dma.done [#allocation6], 2048
    $region49: #{tpu_custom_call.1} parent=1 // pred_fallthru
      _
    // Predicated region
    $region50: #{tpu_custom_call.1} parent=1 // pred_check
      _
    $region51: #{tpu_custom_call.1} parent=1 // pred_check_branch
      %103 = sbr.rel (0) target = $region53
    $region52: #{tpu_custom_call.1} parent=1 // pred_region
      %104 = dma.done [#allocation9], 2048
    $region53: #{tpu_custom_call.1} parent=1 // pred_fallthru
      _
    // Predicated region
    $region54: #{tpu_custom_call.1} parent=1 // pred_check
      _
    $region55: #{tpu_custom_call.1} parent=1 // pred_check_branch
      %106 = sbr.rel (0) target = $region57
    $region56: #{tpu_custom_call.1} parent=1 // pred_region
      %107 = dma.done [#allocation9], 4096
    $region57: #{tpu_custom_call.1} parent=1 // pred_fallthru
      _
    // Predicated region
    $region58: #{tpu_custom_call.1} parent=1 // pred_check
      _
    $region59: #{tpu_custom_call.1} parent=1 // pred_check_branch
      %109 = sbr.rel (0) target = $region61
    $region60: #{tpu_custom_call.1} parent=1 // pred_region
      %110 = dma.done [#allocation12], 1024
    $region61: #{tpu_custom_call.1} parent=1 // pred_fallthru
      _
    %v112 = vld [vmem:[#allocation2] sm:$0xff]
    %v113 = vpack.c.bf16 %v112, %v112
    %v114 = vld [vmem:[#allocation5] sm:$0xff]
    %v115 = vpack.c.bf16 %v114, %v114
    %v116 = vld [vmem:[#allocation7] sm:$0xff]
    %v117 = vld [vmem:[#allocation7 + $0x8] sm:$0xff]
    %v118 = vld [vmem:[#allocation7 + $0x10] sm:$0xff]
    %v119 = vld [vmem:[#allocation7 + $0x18] sm:$0xff]
    %v120 = vld [vmem:[#allocation7 + $0x20] sm:$0xff]
    %v121 = vld [vmem:[#allocation7 + $0x28] sm:$0xff]
    %v122 = vld [vmem:[#allocation7 + $0x30] sm:$0xff]
    %v123 = vld [vmem:[#allocation7 + $0x38] sm:$0xff]
    %v124 = vld [vmem:[#allocation7 + $0x40] sm:$0xff]
    %v125 = vld [vmem:[#allocation7 + $0x48] sm:$0xff]
    %v126 = vld [vmem:[#allocation7 + $0x50] sm:$0xff]
    %v127 = vld [vmem:[#allocation7 + $0x58] sm:$0xff]
    %v128 = vld [vmem:[#allocation7 + $0x60] sm:$0xff]
    %v129 = vld [vmem:[#allocation7 + $0x68] sm:$0xff]
    %v130 = vld [vmem:[#allocation7 + $0x70] sm:$0xff]
    %v131 = vld [vmem:[#allocation7 + $0x78] sm:$0xff]
    %v132 = vld [vmem:[#allocation8] sm:$0xff]
    %v133 = vld [vmem:[#allocation8 + $0x8] sm:$0xff]
    %v134 = vld [vmem:[#allocation8 + $0x10] sm:$0xff]
    %v135 = vld [vmem:[#allocation8 + $0x18] sm:$0xff]
    %v136 = vld [vmem:[#allocation8 + $0x20] sm:$0xff]
    %v137 = vld [vmem:[#allocation8 + $0x28] sm:$0xff]
    %v138 = vld [vmem:[#allocation8 + $0x30] sm:$0xff]
    %v139 = vld [vmem:[#allocation8 + $0x38] sm:$0xff]
    %v140 = vld [vmem:[#allocation8 + $0x40] sm:$0xff]
    %v141 = vld [vmem:[#allocation8 + $0x48] sm:$0xff]
    %v142 = vld [vmem:[#allocation8 + $0x50] sm:$0xff]
    %v143 = vld [vmem:[#allocation8 + $0x58] sm:$0xff]
    %v144 = vld [vmem:[#allocation8 + $0x60] sm:$0xff]
    %v145 = vld [vmem:[#allocation8 + $0x68] sm:$0xff]
    %v146 = vld [vmem:[#allocation8 + $0x70] sm:$0xff]
    %v147 = vld [vmem:[#allocation8 + $0x78] sm:$0xff]
    %v164 = vunpack.c.l.b16 %v132
    %v165 = vunpack.c.h.b16 %v132
    %v166 = vunpack.c.l.b16 %v133
    %v167 = vunpack.c.h.b16 %v133
    %v168 = vunpack.c.l.b16 %v134
    %v169 = vunpack.c.h.b16 %v134
    %v170 = vunpack.c.l.b16 %v135
    %v171 = vunpack.c.h.b16 %v135
    %v172 = vunpack.c.l.b16 %v136
    %v173 = vunpack.c.h.b16 %v136
    %v174 = vunpack.c.l.b16 %v137
    %v175 = vunpack.c.h.b16 %v137
    %v176 = vunpack.c.l.b16 %v138
    %v177 = vunpack.c.h.b16 %v138
    %v178 = vunpack.c.l.b16 %v139
    %v179 = vunpack.c.h.b16 %v139
    %v180 = vunpack.c.l.b16 %v140
    %v181 = vunpack.c.h.b16 %v140
    %v182 = vunpack.c.l.b16 %v141
    %v183 = vunpack.c.h.b16 %v141
    %v184 = vunpack.c.l.b16 %v142
    %v185 = vunpack.c.h.b16 %v142
    %v186 = vunpack.c.l.b16 %v143
    %v187 = vunpack.c.h.b16 %v143
    %v188 = vunpack.c.l.b16 %v144
    %v189 = vunpack.c.h.b16 %v144
    %v190 = vunpack.c.l.b16 %v145
    %v191 = vunpack.c.h.b16 %v145
    %v192 = vunpack.c.l.b16 %v146
    %v193 = vunpack.c.h.b16 %v146
    %v194 = vunpack.c.l.b16 %v147
    %v195 = vunpack.c.h.b16 %v147
    %v196 = vpack.c.b16 %v168, %v164
    %v197 = vpack.c.b16 %v169, %v165
    %v198 = vpack.c.b16 %v170, %v166
    %v199 = vpack.c.b16 %v171, %v167
    %v200 = vpack.c.b16 %v176, %v172
    %v201 = vpack.c.b16 %v177, %v173
    %v202 = vpack.c.b16 %v178, %v174
    %v203 = vpack.c.b16 %v179, %v175
    %v204 = vpack.c.b16 %v184, %v180
    %v205 = vpack.c.b16 %v185, %v181
    %v206 = vpack.c.b16 %v186, %v182
    %v207 = vpack.c.b16 %v187, %v183
    %v208 = vpack.c.b16 %v192, %v188
    %v209 = vpack.c.b16 %v193, %v189
    %v210 = vpack.c.b16 %v194, %v190
    %v211 = vpack.c.b16 %v195, %v191
    %vm228 = vcmask 523264
    %v230 = vsel %vm228, %v115, 0
    %232 = vmatprep.subr.bf16.mxu0 0
    %233 = vmatpush1.bf16.msra.mxu0 0
    %234 = vmatprep.subr.bf16.mxu0 0
    %235 = vmatpush1.bf16.msra.mxu0 0
    %236 = vmatprep.subr.bf16.mxu0 0
    %237 = vmatpush1.bf16.msra.mxu0 0
    %238 = vmatprep.subr.bf16.mxu0 0
    %239 = vmatpush1.bf16.msra.mxu0 0
    %240 = vmatprep.subr.bf16.mxu0 %v209
    %241 = vmatpush1.bf16.msra.mxu0 %v208
    %242 = vmatprep.subr.bf16.mxu0 %v205
    %243 = vmatpush1.bf16.msra.mxu0 %v204
    %244 = vmatprep.subr.bf16.mxu0 %v201
    %245 = vmatpush1.bf16.msra.mxu0 %v200
    %246 = vmatprep.subr.bf16.mxu0 %v197
    %247 = vmatpush1.bf16.msra.mxu0 %v196
    %248 = vmatprep.subr.bf16.mxu0 0
    %249 = vmatpush2.bf16.msra.mxu0 0
    %250 = vmatprep.subr.bf16.mxu0 0
    %251 = vmatpush2.bf16.msra.mxu0 0
    %252 = vmatprep.subr.bf16.mxu0 0
    %253 = vmatpush2.bf16.msra.mxu0 0
    %254 = vmatprep.subr.bf16.mxu0 0
    %255 = vmatpush2.bf16.msra.mxu0 0
    %256 = vmatprep.subr.bf16.mxu0 0
    %257 = vmatpush2.bf16.msra.mxu0 0
    %258 = vmatprep.subr.bf16.mxu0 0
    %259 = vmatpush2.bf16.msra.mxu0 0
    %260 = vmatprep.subr.bf16.mxu0 0
    %261 = vmatpush2.bf16.msra.mxu0 0
    %262 = vmatprep.subr.bf16.mxu0 0
    %263 = vmatpush2.bf16.msra.mxu0 0
    %264 = vmatprep.mubr.bf16.mxu0 0
    %265 = vmatmul.mubr.bf16.gmra.mxu0 %v230
    %v266 = vpop.f32.mrf.mxu0
    %v267 = vadd.f32 0.0, %v266
    %v268 = vpop.f32.mrf.mxu0
    %v269 = vadd.f32 0.0, %v268
    %v270 = vpop.f32.mrf.mxu0
    %v271 = vpop.f32.mrf.mxu0
    %272 = vdwg.mxu0
    %273 = vmatprep.subr.bf16.mxu0 0
    %274 = vmatpush1.bf16.msra.mxu0 0
    %275 = vmatprep.subr.bf16.mxu0 0
    %276 = vmatpush1.bf16.msra.mxu0 0
    %277 = vmatprep.subr.bf16.mxu0 0
    %278 = vmatpush1.bf16.msra.mxu0 0
    %279 = vmatprep.subr.bf16.mxu0 0
    %280 = vmatpush1.bf16.msra.mxu0 0
    %281 = vmatprep.subr.bf16.mxu0 %v211
    %282 = vmatpush1.bf16.msra.mxu0 %v210
    %283 = vmatprep.subr.bf16.mxu0 %v207
    %284 = vmatpush1.bf16.msra.mxu0 %v206
    %285 = vmatprep.subr.bf16.mxu0 %v203
    %286 = vmatpush1.bf16.msra.mxu0 %v202
    %287 = vmatprep.subr.bf16.mxu0 %v199
    %288 = vmatpush1.bf16.msra.mxu0 %v198
    %289 = vmatprep.subr.bf16.mxu0 0
    %290 = vmatpush2.bf16.msra.mxu0 0
    %291 = vmatprep.subr.bf16.mxu0 0
    %292 = vmatpush2.bf16.msra.mxu0 0
    %293 = vmatprep.subr.bf16.mxu0 0
    %294 = vmatpush2.bf16.msra.mxu0 0
    %295 = vmatprep.subr.bf16.mxu0 0
    %296 = vmatpush2.bf16.msra.mxu0 0
    %297 = vmatprep.subr.bf16.mxu0 0
    %298 = vmatpush2.bf16.msra.mxu0 0
    %299 = vmatprep.subr.bf16.mxu0 0
    %300 = vmatpush2.bf16.msra.mxu0 0
    %301 = vmatprep.subr.bf16.mxu0 0
    %302 = vmatpush2.bf16.msra.mxu0 0
    %303 = vmatprep.subr.bf16.mxu0 0
    %304 = vmatpush2.bf16.msra.mxu0 0
    %305 = vmatprep.mubr.bf16.mxu0 0
    %306 = vmatmul.mubr.bf16.gmra.mxu0 %v230
    %v307 = vpop.f32.mrf.mxu0
    %v308 = vadd.f32 0.0, %v307
    %v309 = vpop.f32.mrf.mxu0
    %v310 = vadd.f32 0.0, %v309
    %v311 = vpop.f32.mrf.mxu0
    %v312 = vpop.f32.mrf.mxu0
    %313 = vdwg.mxu0
    %v330 = vunpack.c.l.b16 %v116
    %v331 = vunpack.c.h.b16 %v116
    %v332 = vunpack.c.l.b16 %v117
    %v333 = vunpack.c.h.b16 %v117
    %v334 = vunpack.c.l.b16 %v118
    %v335 = vunpack.c.h.b16 %v118
    %v336 = vunpack.c.l.b16 %v119
    %v337 = vunpack.c.h.b16 %v119
    %v338 = vunpack.c.l.b16 %v120
    %v339 = vunpack.c.h.b16 %v120
    %v340 = vunpack.c.l.b16 %v121
    %v341 = vunpack.c.h.b16 %v121
    %v342 = vunpack.c.l.b16 %v122
    %v343 = vunpack.c.h.b16 %v122
    %v344 = vunpack.c.l.b16 %v123
    %v345 = vunpack.c.h.b16 %v123
    %v346 = vunpack.c.l.b16 %v124
    %v347 = vunpack.c.h.b16 %v124
    %v348 = vunpack.c.l.b16 %v125
    %v349 = vunpack.c.h.b16 %v125
    %v350 = vunpack.c.l.b16 %v126
    %v351 = vunpack.c.h.b16 %v126
    %v352 = vunpack.c.l.b16 %v127
    %v353 = vunpack.c.h.b16 %v127
    %v354 = vunpack.c.l.b16 %v128
    %v355 = vunpack.c.h.b16 %v128
    %v356 = vunpack.c.l.b16 %v129
    %v357 = vunpack.c.h.b16 %v129
    %v358 = vunpack.c.l.b16 %v130
    %v359 = vunpack.c.h.b16 %v130
    %v360 = vunpack.c.l.b16 %v131
    %v361 = vunpack.c.h.b16 %v131
    %v362 = vpack.c.b16 %v334, %v330
    %v363 = vpack.c.b16 %v335, %v331
    %v364 = vpack.c.b16 %v336, %v332
    %v365 = vpack.c.b16 %v337, %v333
    %v366 = vpack.c.b16 %v342, %v338
    %v367 = vpack.c.b16 %v343, %v339
    %v368 = vpack.c.b16 %v344, %v340
    %v369 = vpack.c.b16 %v345, %v341
    %v370 = vpack.c.b16 %v350, %v346
    %v371 = vpack.c.b16 %v351, %v347
    %v372 = vpack.c.b16 %v352, %v348
    %v373 = vpack.c.b16 %v353, %v349
    %v374 = vpack.c.b16 %v358, %v354
    %v375 = vpack.c.b16 %v359, %v355
    %v376 = vpack.c.b16 %v360, %v356
    %v377 = vpack.c.b16 %v361, %v357
    %v395 = vsel %vm228, %v113, 0
    %397 = vmatprep.subr.bf16.mxu0 0
    %398 = vmatpush1.bf16.msra.mxu0 0
    %399 = vmatprep.subr.bf16.mxu0 0
    %400 = vmatpush1.bf16.msra.mxu0 0
    %401 = vmatprep.subr.bf16.mxu0 0
    %402 = vmatpush1.bf16.msra.mxu0 0
    %403 = vmatprep.subr.bf16.mxu0 0
    %404 = vmatpush1.bf16.msra.mxu0 0
    %405 = vmatprep.subr.bf16.mxu0 %v375
    %406 = vmatpush1.bf16.msra.mxu0 %v374
    %407 = vmatprep.subr.bf16.mxu0 %v371
    %408 = vmatpush1.bf16.msra.mxu0 %v370
    %409 = vmatprep.subr.bf16.mxu0 %v367
    %410 = vmatpush1.bf16.msra.mxu0 %v366
    %411 = vmatprep.subr.bf16.mxu0 %v363
    %412 = vmatpush1.bf16.msra.mxu0 %v362
    %413 = vmatprep.subr.bf16.mxu0 0
    %414 = vmatpush2.bf16.msra.mxu0 0
    %415 = vmatprep.subr.bf16.mxu0 0
    %416 = vmatpush2.bf16.msra.mxu0 0
    %417 = vmatprep.subr.bf16.mxu0 0
    %418 = vmatpush2.bf16.msra.mxu0 0
    %419 = vmatprep.subr.bf16.mxu0 0
    %420 = vmatpush2.bf16.msra.mxu0 0
    %421 = vmatprep.subr.bf16.mxu0 0
    %422 = vmatpush2.bf16.msra.mxu0 0
    %423 = vmatprep.subr.bf16.mxu0 0
    %424 = vmatpush2.bf16.msra.mxu0 0
    %425 = vmatprep.subr.bf16.mxu0 0
    %426 = vmatpush2.bf16.msra.mxu0 0
    %427 = vmatprep.subr.bf16.mxu0 0
    %428 = vmatpush2.bf16.msra.mxu0 0
    %429 = vmatprep.mubr.bf16.mxu0 0
    %430 = vmatmul.mubr.bf16.gmra.mxu0 %v395
    %v431 = vpop.f32.mrf.mxu0
    %v432 = vadd.f32 %v267, %v431
    %v433 = vpop.f32.mrf.mxu0
    %v434 = vadd.f32 %v269, %v433
    %v435 = vpop.f32.mrf.mxu0
    %v436 = vpop.f32.mrf.mxu0
    %437 = vdwg.mxu0
    %438 = vmatprep.subr.bf16.mxu0 0
    %439 = vmatpush1.bf16.msra.mxu0 0
    %440 = vmatprep.subr.bf16.mxu0 0
    %441 = vmatpush1.bf16.msra.mxu0 0
    %442 = vmatprep.subr.bf16.mxu0 0
    %443 = vmatpush1.bf16.msra.mxu0 0
    %444 = vmatprep.subr.bf16.mxu0 0
    %445 = vmatpush1.bf16.msra.mxu0 0
    %446 = vmatprep.subr.bf16.mxu0 %v377
    %447 = vmatpush1.bf16.msra.mxu0 %v376
    %448 = vmatprep.subr.bf16.mxu0 %v373
    %449 = vmatpush1.bf16.msra.mxu0 %v372
    %450 = vmatprep.subr.bf16.mxu0 %v369
    %451 = vmatpush1.bf16.msra.mxu0 %v368
    %452 = vmatprep.subr.bf16.mxu0 %v365
    %453 = vmatpush1.bf16.msra.mxu0 %v364
    %454 = vmatprep.subr.bf16.mxu0 0
    %455 = vmatpush2.bf16.msra.mxu0 0
    %456 = vmatprep.subr.bf16.mxu0 0
    %457 = vmatpush2.bf16.msra.mxu0 0
    %458 = vmatprep.subr.bf16.mxu0 0
    %459 = vmatpush2.bf16.msra.mxu0 0
    %460 = vmatprep.subr.bf16.mxu0 0
    %461 = vmatpush2.bf16.msra.mxu0 0
    %462 = vmatprep.subr.bf16.mxu0 0
    %463 = vmatpush2.bf16.msra.mxu0 0
    %464 = vmatprep.subr.bf16.mxu0 0
    %465 = vmatpush2.bf16.msra.mxu0 0
    %466 = vmatprep.subr.bf16.mxu0 0
    %467 = vmatpush2.bf16.msra.mxu0 0
    %468 = vmatprep.subr.bf16.mxu0 0
    %469 = vmatpush2.bf16.msra.mxu0 0
    %470 = vmatprep.mubr.bf16.mxu0 0
    %471 = vmatmul.mubr.bf16.gmra.mxu0 %v395
    %v472 = vpop.f32.mrf.mxu0
    %v473 = vadd.f32 %v308, %v472
    %v474 = vpop.f32.mrf.mxu0
    %v475 = vadd.f32 %v310, %v474
    %v476 = vpop.f32.mrf.mxu0
    %v477 = vpop.f32.mrf.mxu0
    %478 = vdwg.mxu0
    %v479 = vld [vmem:[%s4] sm:$0xf]
    %v481 = vlaneseq
    %v482 = vshrl.u32 %v481, 7
    %v483 = vsub.s32 0, %v482
    %v484 = vrot.slane %v479, %v483
    %v485 = vlaneseq
    %v486 = vshrl.u32 %v485, 7
    %v487 = vsub.s32 1, %v486
    %v488 = vrot.slane %v479, %v487
    %v489 = vlaneseq
    %v490 = vshrl.u32 %v489, 7
    %v491 = vsub.s32 2, %v490
    %v492 = vrot.slane %v479, %v491
    %v493 = vlaneseq
    %v494 = vshrl.u32 %v493, 7
    %v495 = vsub.s32 3, %v494
    %v496 = vrot.slane %v479, %v495
    %v501 = vadd.f32 %v432, %v484
    %v502 = vadd.f32 %v434, %v488
    %v503 = vadd.f32 %v473, %v492
    %v504 = vadd.f32 %v475, %v496
    %v505 = vmax.f32 %v501, 0.0
    %v506 = vmax.f32 %v502, 0.0
    %v507 = vmax.f32 %v503, 0.0
    %v508 = vmax.f32 %v504, 0.0
    %v509 = vpack.c.bf16 %v505, %v505
    %v510 = vpack.c.bf16 %v506, %v506
    %v511 = vpack.c.bf16 %v507, %v507
    %v512 = vpack.c.bf16 %v508, %v508
    %v513 = vld [vmem:[#allocation10] sm:$0xf]
    %v514 = vld [vmem:[#allocation10 + $0x4] sm:$0xf]
    %v515 = vld [vmem:[#allocation10 + $0x8] sm:$0xf]
    %v516 = vld [vmem:[#allocation10 + $0xc] sm:$0xf]
    %v517 = vld [vmem:[#allocation10 + $0x10] sm:$0xf]
    %v518 = vld [vmem:[#allocation10 + $0x14] sm:$0xf]
    %v519 = vld [vmem:[#allocation10 + $0x18] sm:$0xf]
    %v520 = vld [vmem:[#allocation10 + $0x1c] sm:$0xf]
    %v521 = vld [vmem:[#allocation10 + $0x20] sm:$0xf]
    %v522 = vld [vmem:[#allocation10 + $0x24] sm:$0xf]
    %v523 = vld [vmem:[#allocation10 + $0x28] sm:$0xf]
    %v524 = vld [vmem:[#allocation10 + $0x2c] sm:$0xf]
    %v525 = vld [vmem:[#allocation10 + $0x30] sm:$0xf]
    %v526 = vld [vmem:[#allocation10 + $0x34] sm:$0xf]
    %v527 = vld [vmem:[#allocation10 + $0x38] sm:$0xf]
    %v528 = vld [vmem:[#allocation10 + $0x3c] sm:$0xf]
    %v529 = vld [vmem:[#allocation10 + $0x40] sm:$0xf]
    %v530 = vld [vmem:[#allocation10 + $0x44] sm:$0xf]
    %v531 = vld [vmem:[#allocation10 + $0x48] sm:$0xf]
    %v532 = vld [vmem:[#allocation10 + $0x4c] sm:$0xf]
    %v533 = vld [vmem:[#allocation10 + $0x50] sm:$0xf]
    %v534 = vld [vmem:[#allocation10 + $0x54] sm:$0xf]
    %v535 = vld [vmem:[#allocation10 + $0x58] sm:$0xf]
    %v536 = vld [vmem:[#allocation10 + $0x5c] sm:$0xf]
    %v537 = vld [vmem:[#allocation10 + $0x60] sm:$0xf]
    %v538 = vld [vmem:[#allocation10 + $0x64] sm:$0xf]
    %v539 = vld [vmem:[#allocation10 + $0x68] sm:$0xf]
    %v540 = vld [vmem:[#allocation10 + $0x6c] sm:$0xf]
    %v541 = vld [vmem:[#allocation10 + $0x70] sm:$0xf]
    %v542 = vld [vmem:[#allocation10 + $0x74] sm:$0xf]
    %v543 = vld [vmem:[#allocation10 + $0x78] sm:$0xf]
    %v544 = vld [vmem:[#allocation10 + $0x7c] sm:$0xf]
    %v545 = vld [vmem:[#allocation10 + $0x80] sm:$0xf]
    %v546 = vld [vmem:[#allocation10 + $0x84] sm:$0xf]
    %v547 = vld [vmem:[#allocation10 + $0x88] sm:$0xf]
    %v548 = vld [vmem:[#allocation10 + $0x8c] sm:$0xf]
    %v549 = vld [vmem:[#allocation10 + $0x90] sm:$0xf]
    %v550 = vld [vmem:[#allocation10 + $0x94] sm:$0xf]
    %v551 = vld [vmem:[#allocation10 + $0x98] sm:$0xf]
    %v552 = vld [vmem:[#allocation10 + $0x9c] sm:$0xf]
    %v553 = vld [vmem:[#allocation10 + $0xa0] sm:$0xf]
    %v554 = vld [vmem:[#allocation10 + $0xa4] sm:$0xf]
    %v555 = vld [vmem:[#allocation10 + $0xa8] sm:$0xf]
    %v556 = vld [vmem:[#allocation10 + $0xac] sm:$0xf]
    %v557 = vld [vmem:[#allocation10 + $0xb0] sm:$0xf]
    %v558 = vld [vmem:[#allocation10 + $0xb4] sm:$0xf]
    %v559 = vld [vmem:[#allocation10 + $0xb8] sm:$0xf]
    %v560 = vld [vmem:[#allocation10 + $0xbc] sm:$0xf]
    %v561 = vld [vmem:[#allocation10 + $0xc0] sm:$0xf]
    %v562 = vld [vmem:[#allocation10 + $0xc4] sm:$0xf]
    %v563 = vld [vmem:[#allocation10 + $0xc8] sm:$0xf]
    %v564 = vld [vmem:[#allocation10 + $0xcc] sm:$0xf]
    %v565 = vld [vmem:[#allocation10 + $0xd0] sm:$0xf]
    %v566 = vld [vmem:[#allocation10 + $0xd4] sm:$0xf]
    %v567 = vld [vmem:[#allocation10 + $0xd8] sm:$0xf]
    %v568 = vld [vmem:[#allocation10 + $0xdc] sm:$0xf]
    %v569 = vld [vmem:[#allocation10 + $0xe0] sm:$0xf]
    %v570 = vld [vmem:[#allocation10 + $0xe4] sm:$0xf]
    %v571 = vld [vmem:[#allocation10 + $0xe8] sm:$0xf]
    %v572 = vld [vmem:[#allocation10 + $0xec] sm:$0xf]
    %v573 = vld [vmem:[#allocation10 + $0xf0] sm:$0xf]
    %v574 = vld [vmem:[#allocation10 + $0xf4] sm:$0xf]
    %v575 = vld [vmem:[#allocation10 + $0xf8] sm:$0xf]
    %v576 = vld [vmem:[#allocation10 + $0xfc] sm:$0xf]
    %v577 = vld [vmem:[%s6] sm:$0x1]
    %v579 = vlaneseq
    %v580 = vshrl.u32 %v579, 7
    %v581 = vsub.s32 0, %v580
    %v582 = vrot.slane %v577, %v581
    %v648 = vunpack.c.l.b16 %v513
    %v649 = vunpack.c.l.b16 %v514
    %v650 = vunpack.c.l.b16 %v515
    %v651 = vunpack.c.l.b16 %v516
    %v652 = vunpack.c.l.b16 %v517
    %v653 = vunpack.c.l.b16 %v518
    %v654 = vunpack.c.l.b16 %v519
    %v655 = vunpack.c.l.b16 %v520
    %v656 = vunpack.c.l.b16 %v521
    %v657 = vunpack.c.l.b16 %v522
    %v658 = vunpack.c.l.b16 %v523
    %v659 = vunpack.c.l.b16 %v524
    %v660 = vunpack.c.l.b16 %v525
    %v661 = vunpack.c.l.b16 %v526
    %v662 = vunpack.c.l.b16 %v527
    %v663 = vunpack.c.l.b16 %v528
    %v664 = vunpack.c.l.b16 %v529
    %v665 = vunpack.c.l.b16 %v530
    %v666 = vunpack.c.l.b16 %v531
    %v667 = vunpack.c.l.b16 %v532
    %v668 = vunpack.c.l.b16 %v533
    %v669 = vunpack.c.l.b16 %v534
    %v670 = vunpack.c.l.b16 %v535
    %v671 = vunpack.c.l.b16 %v536
    %v672 = vunpack.c.l.b16 %v537
    %v673 = vunpack.c.l.b16 %v538
    %v674 = vunpack.c.l.b16 %v539
    %v675 = vunpack.c.l.b16 %v540
    %v676 = vunpack.c.l.b16 %v541
    %v677 = vunpack.c.l.b16 %v542
    %v678 = vunpack.c.l.b16 %v543
    %v679 = vunpack.c.l.b16 %v544
    %v680 = vunpack.c.l.b16 %v545
    %v681 = vunpack.c.l.b16 %v546
    %v682 = vunpack.c.l.b16 %v547
    %v683 = vunpack.c.l.b16 %v548
    %v684 = vunpack.c.l.b16 %v549
    %v685 = vunpack.c.l.b16 %v550
    %v686 = vunpack.c.l.b16 %v551
    %v687 = vunpack.c.l.b16 %v552
    %v688 = vunpack.c.l.b16 %v553
    %v689 = vunpack.c.l.b16 %v554
    %v690 = vunpack.c.l.b16 %v555
    %v691 = vunpack.c.l.b16 %v556
    %v692 = vunpack.c.l.b16 %v557
    %v693 = vunpack.c.l.b16 %v558
    %v694 = vunpack.c.l.b16 %v559
    %v695 = vunpack.c.l.b16 %v560
    %v696 = vunpack.c.l.b16 %v561
    %v697 = vunpack.c.l.b16 %v562
    %v698 = vunpack.c.l.b16 %v563
    %v699 = vunpack.c.l.b16 %v564
    %v700 = vunpack.c.l.b16 %v565
    %v701 = vunpack.c.l.b16 %v566
    %v702 = vunpack.c.l.b16 %v567
    %v703 = vunpack.c.l.b16 %v568
    %v704 = vunpack.c.l.b16 %v569
    %v705 = vunpack.c.l.b16 %v570
    %v706 = vunpack.c.l.b16 %v571
    %v707 = vunpack.c.l.b16 %v572
    %v708 = vunpack.c.l.b16 %v573
    %v709 = vunpack.c.l.b16 %v574
    %v710 = vunpack.c.l.b16 %v575
    %v711 = vunpack.c.l.b16 %v576
    %v712 = vpack.c.b16 %v649, %v648
    %v713 = vpack.c.b16 %v651, %v650
    %v714 = vpack.c.b16 %v653, %v652
    %v715 = vpack.c.b16 %v655, %v654
    %v716 = vpack.c.b16 %v657, %v656
    %v717 = vpack.c.b16 %v659, %v658
    %v718 = vpack.c.b16 %v661, %v660
    %v719 = vpack.c.b16 %v663, %v662
    %v720 = vpack.c.b16 %v665, %v664
    %v721 = vpack.c.b16 %v667, %v666
    %v722 = vpack.c.b16 %v669, %v668
    %v723 = vpack.c.b16 %v671, %v670
    %v724 = vpack.c.b16 %v673, %v672
    %v725 = vpack.c.b16 %v675, %v674
    %v726 = vpack.c.b16 %v677, %v676
    %v727 = vpack.c.b16 %v679, %v678
    %v728 = vpack.c.b16 %v681, %v680
    %v729 = vpack.c.b16 %v683, %v682
    %v730 = vpack.c.b16 %v685, %v684
    %v731 = vpack.c.b16 %v687, %v686
    %v732 = vpack.c.b16 %v689, %v688
    %v733 = vpack.c.b16 %v691, %v690
    %v734 = vpack.c.b16 %v693, %v692
    %v735 = vpack.c.b16 %v695, %v694
    %v736 = vpack.c.b16 %v697, %v696
    %v737 = vpack.c.b16 %v699, %v698
    %v738 = vpack.c.b16 %v701, %v700
    %v739 = vpack.c.b16 %v703, %v702
    %v740 = vpack.c.b16 %v705, %v704
    %v741 = vpack.c.b16 %v707, %v706
    %v742 = vpack.c.b16 %v709, %v708
    %v743 = vpack.c.b16 %v711, %v710
    %776 = vmatprep.subr.bf16.mxu0 0
    %777 = vmatpush1.bf16.msra.mxu0 %v719
    %778 = vmatprep.subr.bf16.mxu0 0
    %779 = vmatpush1.bf16.msra.mxu0 %v718
    %780 = vmatprep.subr.bf16.mxu0 0
    %781 = vmatpush1.bf16.msra.mxu0 %v717
    %782 = vmatprep.subr.bf16.mxu0 0
    %783 = vmatpush1.bf16.msra.mxu0 %v716
    %784 = vmatprep.subr.bf16.mxu0 0
    %785 = vmatpush1.bf16.msra.mxu0 %v715
    %786 = vmatprep.subr.bf16.mxu0 0
    %787 = vmatpush1.bf16.msra.mxu0 %v714
    %788 = vmatprep.subr.bf16.mxu0 0
    %789 = vmatpush1.bf16.msra.mxu0 %v713
    %790 = vmatprep.subr.bf16.mxu0 0
    %791 = vmatpush1.bf16.msra.mxu0 %v712
    %792 = vmatprep.subr.bf16.mxu0 0
    %793 = vmatpush2.bf16.msra.mxu0 %v727
    %794 = vmatprep.subr.bf16.mxu0 0
    %795 = vmatpush2.bf16.msra.mxu0 %v726
    %796 = vmatprep.subr.bf16.mxu0 0
    %797 = vmatpush2.bf16.msra.mxu0 %v725
    %798 = vmatprep.subr.bf16.mxu0 0
    %799 = vmatpush2.bf16.msra.mxu0 %v724
    %800 = vmatprep.subr.bf16.mxu0 0
    %801 = vmatpush2.bf16.msra.mxu0 %v723
    %802 = vmatprep.subr.bf16.mxu0 0
    %803 = vmatpush2.bf16.msra.mxu0 %v722
    %804 = vmatprep.subr.bf16.mxu0 0
    %805 = vmatpush2.bf16.msra.mxu0 %v721
    %806 = vmatprep.subr.bf16.mxu0 0
    %807 = vmatpush2.bf16.msra.mxu0 %v720
    %808 = vmatprep.mubr.bf16.mxu0 %v510
    %809 = vmatmul.mubr.bf16.gmra.mxu0 %v509
    %v810 = vpop.f32.mrf.mxu0
    %v811 = vadd.f32 %v582, %v810
    %v812 = vpop.f32.mrf.mxu0
    %v813 = vpop.f32.mrf.mxu0
    %v814 = vpop.f32.mrf.mxu0
    %815 = vdwg.mxu0
    %816 = vmatprep.subr.bf16.mxu0 0
    %817 = vmatpush1.bf16.msra.mxu0 %v735
    %818 = vmatprep.subr.bf16.mxu0 0
    %819 = vmatpush1.bf16.msra.mxu0 %v734
    %820 = vmatprep.subr.bf16.mxu0 0
    %821 = vmatpush1.bf16.msra.mxu0 %v733
    %822 = vmatprep.subr.bf16.mxu0 0
    %823 = vmatpush1.bf16.msra.mxu0 %v732
    %824 = vmatprep.subr.bf16.mxu0 0
    %825 = vmatpush1.bf16.msra.mxu0 %v731
    %826 = vmatprep.subr.bf16.mxu0 0
    %827 = vmatpush1.bf16.msra.mxu0 %v730
    %828 = vmatprep.subr.bf16.mxu0 0
    %829 = vmatpush1.bf16.msra.mxu0 %v729
    %830 = vmatprep.subr.bf16.mxu0 0
    %831 = vmatpush1.bf16.msra.mxu0 %v728
    %832 = vmatprep.subr.bf16.mxu0 0
    %833 = vmatpush2.bf16.msra.mxu0 %v743
    %834 = vmatprep.subr.bf16.mxu0 0
    %835 = vmatpush2.bf16.msra.mxu0 %v742
    %836 = vmatprep.subr.bf16.mxu0 0
    %837 = vmatpush2.bf16.msra.mxu0 %v741
    %838 = vmatprep.subr.bf16.mxu0 0
    %839 = vmatpush2.bf16.msra.mxu0 %v740
    %840 = vmatprep.subr.bf16.mxu0 0
    %841 = vmatpush2.bf16.msra.mxu0 %v739
    %842 = vmatprep.subr.bf16.mxu0 0
    %843 = vmatpush2.bf16.msra.mxu0 %v738
    %844 = vmatprep.subr.bf16.mxu0 0
    %845 = vmatpush2.bf16.msra.mxu0 %v737
    %846 = vmatprep.subr.bf16.mxu0 0
    %847 = vmatpush2.bf16.msra.mxu0 %v736
    %848 = vmatprep.mubr.bf16.mxu0 %v512
    %849 = vmatmul.mubr.bf16.gmra.mxu0 %v511
    %v850 = vpop.f32.mrf.mxu0
    %v851 = vadd.f32 %v811, %v850
    %v852 = vpop.f32.mrf.mxu0
    %v853 = vpop.f32.mrf.mxu0
    %v854 = vpop.f32.mrf.mxu0
    %855 = vdwg.mxu0
    %v856 = vmax.f32 %v851, 0.0
    %v857 = vpack.c.bf16 %v856, %v856
    %v858 = vld [vmem:[#allocation11] sm:$0xf]
    %v859 = vld [vmem:[#allocation11 + $0x4] sm:$0xf]
    %v860 = vld [vmem:[#allocation11 + $0x8] sm:$0xf]
    %v861 = vld [vmem:[#allocation11 + $0xc] sm:$0xf]
    %v862 = vld [vmem:[#allocation11 + $0x10] sm:$0xf]
    %v863 = vld [vmem:[#allocation11 + $0x14] sm:$0xf]
    %v864 = vld [vmem:[#allocation11 + $0x18] sm:$0xf]
    %v865 = vld [vmem:[#allocation11 + $0x1c] sm:$0xf]
    %v866 = vld [vmem:[#allocation11 + $0x20] sm:$0xf]
    %v867 = vld [vmem:[#allocation11 + $0x24] sm:$0xf]
    %v868 = vld [vmem:[#allocation11 + $0x28] sm:$0xf]
    %v869 = vld [vmem:[#allocation11 + $0x2c] sm:$0xf]
    %v870 = vld [vmem:[#allocation11 + $0x30] sm:$0xf]
    %v871 = vld [vmem:[#allocation11 + $0x34] sm:$0xf]
    %v872 = vld [vmem:[#allocation11 + $0x38] sm:$0xf]
    %v873 = vld [vmem:[#allocation11 + $0x3c] sm:$0xf]
    %v874 = vld [vmem:[%s8] sm:$0x1]
    %v876 = vlaneseq
    %v877 = vshrl.u32 %v876, 7
    %v878 = vsub.s32 0, %v877
    %v879 = vrot.slane %v874, %v878
    %v897 = vunpack.c.l.b16 %v858
    %v898 = vunpack.c.l.b16 %v859
    %v899 = vunpack.c.l.b16 %v860
    %v900 = vunpack.c.l.b16 %v861
    %v901 = vunpack.c.l.b16 %v862
    %v902 = vunpack.c.l.b16 %v863
    %v903 = vunpack.c.l.b16 %v864
    %v904 = vunpack.c.l.b16 %v865
    %v905 = vunpack.c.l.b16 %v866
    %v906 = vunpack.c.l.b16 %v867
    %v907 = vunpack.c.l.b16 %v868
    %v908 = vunpack.c.l.b16 %v869
    %v909 = vunpack.c.l.b16 %v870
    %v910 = vunpack.c.l.b16 %v871
    %v911 = vunpack.c.l.b16 %v872
    %v912 = vunpack.c.l.b16 %v873
    %v913 = vpack.c.b16 %v898, %v897
    %v914 = vpack.c.b16 %v900, %v899
    %v915 = vpack.c.b16 %v902, %v901
    %v916 = vpack.c.b16 %v904, %v903
    %v917 = vpack.c.b16 %v906, %v905
    %v918 = vpack.c.b16 %v908, %v907
    %v919 = vpack.c.b16 %v910, %v909
    %v920 = vpack.c.b16 %v912, %v911
    %929 = vmatprep.subr.bf16.mxu0 0
    %930 = vmatpush1.bf16.msra.mxu0 %v920
    %931 = vmatprep.subr.bf16.mxu0 0
    %932 = vmatpush1.bf16.msra.mxu0 %v919
    %933 = vmatprep.subr.bf16.mxu0 0
    %934 = vmatpush1.bf16.msra.mxu0 %v918
    %935 = vmatprep.subr.bf16.mxu0 0
    %936 = vmatpush1.bf16.msra.mxu0 %v917
    %937 = vmatprep.subr.bf16.mxu0 0
    %938 = vmatpush1.bf16.msra.mxu0 %v916
    %939 = vmatprep.subr.bf16.mxu0 0
    %940 = vmatpush1.bf16.msra.mxu0 %v915
    %941 = vmatprep.subr.bf16.mxu0 0
    %942 = vmatpush1.bf16.msra.mxu0 %v914
    %943 = vmatprep.subr.bf16.mxu0 0
    %944 = vmatpush1.bf16.msra.mxu0 %v913
    %945 = vmatprep.subr.bf16.mxu0 0
    %946 = vmatpush2.bf16.msra.mxu0 0
    %947 = vmatprep.subr.bf16.mxu0 0
    %948 = vmatpush2.bf16.msra.mxu0 0
    %949 = vmatprep.subr.bf16.mxu0 0
    %950 = vmatpush2.bf16.msra.mxu0 0
    %951 = vmatprep.subr.bf16.mxu0 0
    %952 = vmatpush2.bf16.msra.mxu0 0
    %953 = vmatprep.subr.bf16.mxu0 0
    %954 = vmatpush2.bf16.msra.mxu0 0
    %955 = vmatprep.subr.bf16.mxu0 0
    %956 = vmatpush2.bf16.msra.mxu0 0
    %957 = vmatprep.subr.bf16.mxu0 0
    %958 = vmatpush2.bf16.msra.mxu0 0
    %959 = vmatprep.subr.bf16.mxu0 0
    %960 = vmatpush2.bf16.msra.mxu0 0
    %961 = vmatprep.mubr.bf16.mxu0 0
    %962 = vmatmul.mubr.bf16.gmra.mxu0 %v857
    %v963 = vpop.f32.mrf.mxu0
    %v964 = vadd.f32 %v879, %v963
    %v965 = vpop.f32.mrf.mxu0
    %v966 = vpop.f32.mrf.mxu0
    %v967 = vpop.f32.mrf.mxu0
    %968 = vdwg.mxu0
    %969 = vst [vmem:[#allocation13] sm:$0xff] %v964
    // Predicated region
    $region62: #{tpu_custom_call.1} parent=1 // pred_check
      _
    $region63: #{tpu_custom_call.1} parent=1 // pred_check_branch
      %971 = sbr.rel (0) target = $region65
    $region64: #{tpu_custom_call.1} parent=1 // pred_region
      %s973 = ssub.s32 128, 128
      %974 = vsyncadd [#allocation4], %s973
      %s976 = sshll.u32 [#allocation13], 4
      %s977 = int_to_ptr.vmem [resolvable:$true] %s976
      %979 = dma.vmem_to_hbm [thread:$0]  %s977, 128, %s9, [#allocation4]
    $region65: #{tpu_custom_call.1} parent=1 // pred_fallthru
      _
    // Predicated region
    $region66: #{tpu_custom_call.1} parent=1 // pred_check
      _
    $region67: #{tpu_custom_call.1} parent=1 // pred_check_branch
      %981 = sbr.rel (0) target = $region69
    $region68: #{tpu_custom_call.1} parent=1 // pred_region
      %982 = dma.done [#allocation4], 128
    $region69: #{tpu_custom_call.1} parent=1 // pred_fallthru
      _
    %983 = vsyncpa [#allocation3], 1
    %984 = vsyncpa [#allocation6], 1
    %985 = vsyncpa [#allocation9], 1
    %986 = vsyncpa [#allocation12], 1
    %987 = vsyncpa [#allocation4], 1

</llo_original>
